<compile_context>
chip_gen: v7x
topology: tpu7x:2x2x1
jax: 0.10.0
libtpu: 0.0.40
codegen_flags: <defaults>
</compile_context>

<pallas_src>
import math

import jax
import jax.numpy as jnp
from jax.experimental import pallas as pl
from jax.experimental.pallas import tpu as pltpu


def harmonics(n: int) -> jnp.ndarray:
    """Cosine harmonics for the DCT transform (matches the torch version)."""
    spatial = jnp.arange(float(n)).reshape((n, 1))
    spectral = jnp.arange(float(n)).reshape((1, n))
    spatial = 2.0 * spatial + 1.0
    spectral = spectral * math.pi / (2.0 * n)
    return jnp.cos(spatial @ spectral)


def normalize_matrix(n: int) -> jnp.ndarray:
    """Constant scale factor which makes the DCT orthonormal."""
    norm = jnp.ones((n, 1)).at[0, 0].set(1.0 / math.sqrt(2.0))
    return norm @ norm.T


def _round_up(x: int, m: int) -> int:
    return ((x + m - 1) // m) * m


def _round_down(x: int, m: int) -> int:
    return (x // m) * m


def _cdiv(a: int, b: int) -> int:
    return -(-a // b)


def _vmem_limit_bytes() -> int:
    """Generation-aware VMEM budget (v5e/v6e: 128 MiB, v7x: 64 MiB physical)."""
    try:
        cap = int(pltpu.get_tpu_info().vmem_capacity_bytes)
    except Exception:
        cap = 64 * 1024 * 1024          # conservative fallback (= v7x per-TC)
    # Leave ~25% headroom for compiler scratch / internal buffers.
    return min((cap * 3) // 4, 112 * 1024 * 1024)


# ---------------------------------------------------------------------------
# Kernels
# ---------------------------------------------------------------------------
def _dct2d_kron_kernel(dt_ref, x_ref, o_ref):
    # dt_ref: (N*N, N*N) resident Kron operator (coeff folded in, same dtype
    #         family as the input so the MXU dot is homogeneous).
    # x_ref:  (TM, N*N)  flattened image planes (native dtype, no casts).
    # o_ref:  (TM, N*N)  lane-dense output block (256-wide for N=16).
    o_ref[...] = jnp.dot(
        x_ref[...], dt_ref[...], preferred_element_type=jnp.float32
    ).astype(o_ref.dtype)


def _dct2d_planes_kernel(hl_ref, hr_ref, x_ref, o_ref):
    # Separable path for large N, coeff folded (rank-1 split, exact):
    #   hl_ref: (N, N) = sqrt(scale) * diag(nv) @ H^T
    #   hr_ref: (N, N) = sqrt(scale) * H @ diag(nv)
    #   x_ref / o_ref: (TB, N, N)
    tb, n, _ = x_ref.shape
    x = x_ref[...]
    hr = hr_ref[...]
    hl = hl_ref[...]

    if n % 8 == 0:
        # Right multiply as ONE flat GEMM over all TB planes -> full MXU
        # occupancy in M (TB*N rows) instead of N-wide per-plane matmuls.
        t = jnp.dot(
            x.reshape(tb * n, n), hr, preferred_element_type=jnp.float32
        ).reshape(tb, n, n)
    else:
        hr_b = jnp.broadcast_to(hr, (tb, n, n))
        t = jnp.einsum("brc,bcv->brv", x, hr_b,
                       preferred_element_type=jnp.float32)

    if hl.dtype != jnp.float32:
        t = t.astype(hl.dtype)          # keep the second dot homogeneous

    # Left multiply as a single batched GEMM (no serial scf.for per plane).
    hl_b = jnp.broadcast_to(hl, (tb, n, n))
    y = jnp.einsum("bur,brv->buv", hl_b, t, preferred_element_type=jnp.float32)

    # TODO(synk): for N % 128 != 0 this store is lane-masked; padding the
    # trailing dim to 128 would trade extra HBM write traffic for unmasked vst.
    o_ref[...] = y.astype(o_ref.dtype)


# ---------------------------------------------------------------------------
# Wrapper
# ---------------------------------------------------------------------------
def dct2d_forward(img: jnp.ndarray, img_size: int) -> jnp.ndarray:
    """Pallas implementation of Dct2DForward.forward for NCHW (or ...HW) input."""
    n = img_size
    assert img.shape[-1] == n and img.shape[-2] == n
    nn = n * n

    in_dtype = jnp.dtype(img.dtype)
    out_dtype = img.dtype
    in_item = in_dtype.itemsize
    out_item = jnp.dtype(out_dtype).itemsize

    # Operator dtype matches the input: homogeneous bf16xbf16->f32 is the
    # full-rate MXU path on all generations; f32 inputs keep an f32 operator
    # (f32 accumulation, matches the torch module's numerics).
    op_dtype = jnp.bfloat16 if in_dtype == jnp.dtype(jnp.bfloat16) else jnp.float32
    op_item = jnp.dtype(op_dtype).itemsize

    batch_dims = img.shape[:-2]
    bc = 1
    for d in batch_dims:
        bc *= d
    if bc == 0:
        return img

    h = harmonics(n).astype(jnp.float32)
    scale = 1.0 / math.sqrt(2.0 * n)
    coeff = (scale * normalize_matrix(n)).astype(jnp.float32)

    vmem_limit = _vmem_limit_bytes()

    # Kron does 2N^4 FLOPs/plane vs 4N^3 separable (N/2x inflation); its
    # arithmetic intensity is ~2N^2/(in+out bytes).  Only take it while it
    # stays HBM-bound on every generation (v5e's MXU ridge is the tightest):
    # N <= 16 for 32-bit inputs, N <= 24 for bf16.
    use_kron = (n <= 16) if op_item >= 4 else (n <= 24)

    if use_kron:
        # ---- Kron GEMM path (small N) ----
        # vec_row(coeff * (H^T X H)) = vec_row(X) @ [(H kron H) * vec_row(coeff)]
        dt = (jnp.kron(h, h) * coeff.reshape(1, nn)).astype(op_dtype)
        dt_bytes = nn * nn * op_item

        x = img.reshape((bc, nn))            # no pad, no dtype cast

        # Tile rows: as big as the VMEM budget allows.  Per step we hold
        # double-buffered x/out tiles plus the (double-buffered) resident Dt.
        row_bytes = nn * (in_item + out_item)
        usable = max(8 * row_bytes, int(vmem_limit * 0.8) - 2 * dt_bytes)
        tm_max = max(8, usable // (2 * row_bytes))

        if bc <= 8:
            tm = bc                           # block == full dim (always legal)
        else:
            tm = max(8, _round_down(min(tm_max, bc), 8))
            if tm >= 512:
                tm = _round_down(tm, 256)     # MXU-aligned M passes (v6e/v7x)
            steps = _cdiv(bc, tm)
            # v7x has 2 TensorCores per chip: with plenty of work, prefer an
            # even number of balanced grid steps so both cores stay busy.
            if bc >= 1024 and (steps < 2 or steps % 2):
                steps = max(2, steps + (steps % 2))
                tm = max(8, _round_up(_cdiv(bc, steps), 8))

        grid = (_cdiv(bc, tm),)
        flops = 2 * bc * nn * nn
        bytes_accessed = bc * nn * (in_item + out_item) + dt_bytes

        out = pl.pallas_call(
            _dct2d_kron_kernel,
            out_shape=jax.ShapeDtypeStruct((bc, nn), out_dtype),
            grid_spec=pltpu.PrefetchScalarGridSpec(
                num_scalar_prefetch=0,
                grid=grid,
                in_specs=[
                    pl.BlockSpec((nn, nn), lambda i: (0, 0)),   # Dt: resident
                    pl.BlockSpec((tm, nn), lambda i: (i, 0)),   # x tile
                ],
                out_specs=pl.BlockSpec((tm, nn), lambda i: (i, 0)),
            ),
            compiler_params=pltpu.CompilerParams(
                dimension_semantics=("parallel",),
                vmem_limit_bytes=vmem_limit,
            ),
            cost_estimate=pl.CostEstimate(
                flops=flops, transcendentals=0, bytes_accessed=bytes_accessed
            ),
        )(dt, x)
        return out.reshape(img.shape)

    # ---- Separable path (larger N) ----
    # coeff = scale * (nv nv^T) is rank-1, so the split below is exact:
    #   Y = (sqrt(scale) diag(nv) H^T) X (sqrt(scale) H diag(nv))
    sqrt_scale = math.sqrt(scale)
    nv = jnp.ones((n,), jnp.float32).at[0].set(1.0 / math.sqrt(2.0))
    hl = ((sqrt_scale * nv[:, None]) * h.T).astype(op_dtype)
    hr = (h * (sqrt_scale * nv[None, :])).astype(op_dtype)

    x = img.reshape((bc, n, n))               # no pad, no dtype cast

    # Per-plane VMEM: double-buffered in/out + f32 intermediates + broadcast
    # operators (generous accounting).
    per_plane = nn * (2 * in_item + 2 * out_item + 16)
    tb = max(1, min(bc, int(vmem_limit * 0.6) // per_plane))
    grid = (_cdiv(bc, tb),)

    flops = 4 * bc * n * n * n
    bytes_accessed = bc * nn * (in_item + out_item) + 2 * nn * op_item

    out = pl.pallas_call(
        _dct2d_planes_kernel,
        out_shape=jax.ShapeDtypeStruct((bc, n, n), out_dtype),
        grid_spec=pltpu.PrefetchScalarGridSpec(
            num_scalar_prefetch=0,
            grid=grid,
            in_specs=[
                pl.BlockSpec((n, n), lambda i: (0, 0)),        # HL resident
                pl.BlockSpec((n, n), lambda i: (0, 0)),        # HR resident
                pl.BlockSpec((tb, n, n), lambda i: (i, 0, 0)),  # plane batch
            ],
            out_specs=pl.BlockSpec((tb, n, n), lambda i: (i, 0, 0)),
        ),
        compiler_params=pltpu.CompilerParams(
            dimension_semantics=("parallel",),
            vmem_limit_bytes=vmem_limit,
        ),
        cost_estimate=pl.CostEstimate(
            flops=flops, transcendentals=0, bytes_accessed=bytes_accessed
        ),
    )(hl, hr, x)
    return out.reshape(img.shape)


if __name__ == "__main__":
    def reference(x, n):
        hm = harmonics(n).astype(jnp.float32)
        cf = (1.0 / math.sqrt(2.0 * n)) * normalize_matrix(n).astype(jnp.float32)
        return cf * jnp.einsum("ij,...jk,kl->...il", hm.T, x.astype(jnp.float32), hm)

    # Main case: f32 NCHW, img_size=16 (Kron GEMM path).
    B, C, N = 2, 4, 16
    img = jax.random.normal(jax.random.PRNGKey(0), (B, C, N, N), dtype=jnp.float32)
    out = jax.block_until_ready(dct2d_forward(img, img_size=N))
    assert out.shape == img.shape and out.dtype == img.dtype
    assert jnp.allclose(out, reference(img, N), atol=1e-3, rtol=1e-3)

    # Ragged batch (bc=15, not a multiple of the tile): exercises the
    # pad-free cdiv grid with a masked last block.
    img2 = jax.random.normal(jax.random.PRNGKey(1), (3, 5, N, N), dtype=jnp.float32)
    out2 = jax.block_until_ready(dct2d_forward(img2, img_size=N))
    assert jnp.allclose(out2, reference(img2, N), atol=1e-3, rtol=1e-3)

    # bf16 input: homogeneous bf16 x bf16 -> f32 Kron dot, bf16 output.
    img3 = jax.random.normal(jax.random.PRNGKey(2), (2, 4, N, N), dtype=jnp.bfloat16)
    out3 = jax.block_until_ready(dct2d_forward(img3, img_size=N))
    assert out3.dtype == jnp.bfloat16
    assert jnp.allclose(out3.astype(jnp.float32), reference(img3, N),
                        atol=3e-2, rtol=3e-2)

    print("KERNEL_OK")
</pallas_src>

<mosaic_0001>
module attributes {stable_mosaic.version = 11 : i64} {
  func.func @_dct2d_kron_kernel(%arg0: i32, %arg1: memref<256x256xf32, #tpu.memory_space<vmem>>, %arg2: memref<8x256xf32, #tpu.memory_space<vmem>>, %arg3: memref<8x256xf32, #tpu.memory_space<vmem>>) attributes {dimension_semantics = [#tpu.dimension_semantics<parallel>], iteration_bounds = array<i64: 1>, scalar_prefetch = 0 : i64, scratch_operands = 0 : i64, tpu.core_type = #tpu.core_type<tc>, window_params = [{pipeline_mode = #tpu.pipeline_mode<synchronous>, transform_indices = @transform_0, window_bounds = array<i64: 256, 256>}, {transform_indices = @transform_1, window_bounds = array<i64: 8, 256>}, {transform_indices = @transform_2, window_bounds = array<i64: 8, 256>}]} {
    %c0 = arith.constant 0 : index
    %c0_0 = arith.constant 0 : index
    %0 = vector.load %arg2[%c0, %c0_0] : memref<8x256xf32, #tpu.memory_space<vmem>>, vector<8x256xf32>
    %c0_1 = arith.constant 0 : index
    %c0_2 = arith.constant 0 : index
    %1 = vector.load %arg1[%c0_1, %c0_2] : memref<256x256xf32, #tpu.memory_space<vmem>>, vector<256x256xf32>
    %cst = arith.constant dense<0.000000e+00> : vector<8x256xf32>
    %2 = tpu.matmul %0, %1, %cst {dimension_numbers = #tpu.dot_dimension_numbers<[1], [0], [0], [1], [0, 0, 1, 1], [], []>} : vector<8x256xf32>, vector<256x256xf32>, vector<8x256xf32> -> vector<8x256xf32>
    %c0_3 = arith.constant 0 : index
    %c0_4 = arith.constant 0 : index
    %3 = vector.load %arg3[%c0_3, %c0_4] : memref<8x256xf32, #tpu.memory_space<vmem>>, vector<8x256xf32>
    tpu.vector_store %arg3[%c0_3, %c0_4], %2 {strides = array<i32>} : memref<8x256xf32, #tpu.memory_space<vmem>>, vector<8x256xf32>,
    return
  }
  func.func @transform_0(%arg0: i32) -> (i32, i32) {
    %c0_i32 = arith.constant 0 : i32
    %c0_i32_0 = arith.constant 0 : i32
    %c0_i32_1 = arith.constant 0 : i32
    return %c0_i32, %c0_i32_0 : i32, i32
  }
  func.func @transform_1(%arg0: i32) -> (i32, i32) {
    %c0_i32 = arith.constant 0 : i32
    %c0_i32_0 = arith.constant 0 : i32
    return %arg0, %c0_i32 : i32, i32
  }
  func.func @transform_2(%arg0: i32) -> (i32, i32) {
    %c0_i32 = arith.constant 0 : i32
    %c0_i32_0 = arith.constant 0 : i32
    return %arg0, %c0_i32 : i32, i32
  }
}

</mosaic_0001>

<llo_original>
// kernel: tpu_custom_call.1
$region0: #{tpu_custom_call.1}
  #allocation0 [shape = 'u32[]', space=smem, size = 0x4, offset = 0x4, fixed_abs, tag = 'smem constant byte address 0x4 - core index']
  #allocation1 [shape = 'u32[144,128]{1,0:T(1,128)}', space=vmem, size = 0x12000, scoped, tag = 'internal scratch']
  %s0 = inlined_call_operand.hbm [shape: f32[256,256], index: 0, kind: input, shape index: {}]
  %s1 = inlined_call_operand.hbm [shape: f32[8,256], index: 1, kind: input, shape index: {}]
  %s2 = inlined_call_operand.hbm [shape: f32[8,256], index: 2, kind: output, shape index: {}]
  %s3 = sld [smem:[#allocation0]]
  $region26: #{tpu_custom_call.1} parent=0
    _
  %s5 = ssub.s32 1, %s3
  %s6 = scalar_select 0, %s5, %s3
  $region1: #{tpu_custom_call.1} parent=0
    #allocation2 [shape = 'u8[262144]{0}', space=vmem, size = 0x40000, scoped, tag = 'input window, operand 0, single buffered']
    #allocation3 [shape = 's32[1]{0}', space=sflag, size = 0x4, scoped, tag = 'scoped memory for tpu_custom_call.1']
    #allocation4 [shape = 's32[1]{0}', space=sflag, size = 0x4, scoped, tag = 'scoped memory for tpu_custom_call.1']
    #allocation5 [shape = 'u8[8192]{0}', space=vmem, size = 0x2000, scoped, tag = 'input window, operand 1, single buffered']
    #allocation6 [shape = 's32[1]{0}', space=sflag, size = 0x4, scoped, tag = 'scoped memory for tpu_custom_call.1']
    #allocation7 [shape = 'u8[8192]{0}', space=vmem, size = 0x2000, scoped, tag = 'output window, operand 0, single buffered']
    %7 = vsyncpa [#allocation3], 0
    %8 = vsyncpa [#allocation6], 0
    %9 = vsyncpa [#allocation4], 0
    // Predicated region
    $region2: #{tpu_custom_call.1} parent=1 // pred_check
      _
    $region3: #{tpu_custom_call.1} parent=1 // pred_check_branch
      %11 = sbr.rel (0) target = $region5
    $region4: #{tpu_custom_call.1} parent=1 // pred_region
      %s13 = ssub.s32 8192, 8192
      %14 = vsyncadd [#allocation3], %s13
      %s15 = sshll.u32 [#allocation2], 4
      %s16 = int_to_ptr.vmem [resolvable:$true] %s15
      %21 = dma.hbm_to_vmem [thread:$0]  %s0, 8192, %s16, [#allocation3], 256, 256, 16
    $region5: #{tpu_custom_call.1} parent=1 // pred_fallthru
      _
    // Predicated region
    $region6: #{tpu_custom_call.1} parent=1 // pred_check
      _
    $region7: #{tpu_custom_call.1} parent=1 // pred_check_branch
      %23 = sbr.rel (0) target = $region9
    $region8: #{tpu_custom_call.1} parent=1 // pred_region
      %s25 = ssub.s32 256, 256
      %26 = vsyncadd [#allocation6], %s25
      %s28 = sshll.u32 [#allocation5], 4
      %s29 = int_to_ptr.vmem [resolvable:$true] %s28
      %31 = dma.hbm_to_vmem [thread:$0]  %s1, 256, %s29, [#allocation6]
    $region9: #{tpu_custom_call.1} parent=1 // pred_fallthru
      _
    // Predicated region
    $region10: #{tpu_custom_call.1} parent=1 // pred_check
      _
    $region11: #{tpu_custom_call.1} parent=1 // pred_check_branch
      %33 = sbr.rel (0) target = $region13
    $region12: #{tpu_custom_call.1} parent=1 // pred_region
      %34 = dma.done [#allocation3], 8192
    $region13: #{tpu_custom_call.1} parent=1 // pred_fallthru
      _
    // Predicated region
    $region14: #{tpu_custom_call.1} parent=1 // pred_check
      _
    $region15: #{tpu_custom_call.1} parent=1 // pred_check_branch
      %36 = sbr.rel (0) target = $region17
    $region16: #{tpu_custom_call.1} parent=1 // pred_region
      %37 = dma.done [#allocation6], 256
    $region17: #{tpu_custom_call.1} parent=1 // pred_fallthru
      _
    %v38 = vld [vmem:[#allocation5] sm:$0xff]
    %v39 = vld [vmem:[#allocation5 + $0x8] sm:$0xff]
    %v40 = vld [vmem:[#allocation2] sm:$0xff]
    %v41 = vld [vmem:[#allocation2 + $0x8] sm:$0xff]
    %v42 = vld [vmem:[#allocation2 + $0x10] sm:$0xff]
    %v43 = vld [vmem:[#allocation2 + $0x18] sm:$0xff]
    %v44 = vld [vmem:[#allocation2 + $0x20] sm:$0xff]
    %v45 = vld [vmem:[#allocation2 + $0x28] sm:$0xff]
    %v46 = vld [vmem:[#allocation2 + $0x30] sm:$0xff]
    %v47 = vld [vmem:[#allocation2 + $0x38] sm:$0xff]
    %v48 = vld [vmem:[#allocation2 + $0x40] sm:$0xff]
    %v49 = vld [vmem:[#allocation2 + $0x48] sm:$0xff]
    %v50 = vld [vmem:[#allocation2 + $0x50] sm:$0xff]
    %v51 = vld [vmem:[#allocation2 + $0x58] sm:$0xff]
    %v52 = vld [vmem:[#allocation2 + $0x60] sm:$0xff]
    %v53 = vld [vmem:[#allocation2 + $0x68] sm:$0xff]
    %v54 = vld [vmem:[#allocation2 + $0x70] sm:$0xff]
    %v55 = vld [vmem:[#allocation2 + $0x78] sm:$0xff]
    %v56 = vld [vmem:[#allocation2 + $0x80] sm:$0xff]
    %v57 = vld [vmem:[#allocation2 + $0x88] sm:$0xff]
    %v58 = vld [vmem:[#allocation2 + $0x90] sm:$0xff]
    %v59 = vld [vmem:[#allocation2 + $0x98] sm:$0xff]
    %v60 = vld [vmem:[#allocation2 + $0xa0] sm:$0xff]
    %v61 = vld [vmem:[#allocation2 + $0xa8] sm:$0xff]
    %v62 = vld [vmem:[#allocation2 + $0xb0] sm:$0xff]
    %v63 = vld [vmem:[#allocation2 + $0xb8] sm:$0xff]
    %v64 = vld [vmem:[#allocation2 + $0xc0] sm:$0xff]
    %v65 = vld [vmem:[#allocation2 + $0xc8] sm:$0xff]
    %v66 = vld [vmem:[#allocation2 + $0xd0] sm:$0xff]
    %v67 = vld [vmem:[#allocation2 + $0xd8] sm:$0xff]
    %v68 = vld [vmem:[#allocation2 + $0xe0] sm:$0xff]
    %v69 = vld [vmem:[#allocation2 + $0xe8] sm:$0xff]
    %v70 = vld [vmem:[#allocation2 + $0xf0] sm:$0xff]
    %v71 = vld [vmem:[#allocation2 + $0xf8] sm:$0xff]
    %v72 = vld [vmem:[#allocation2 + $0x100] sm:$0xff]
    %v73 = vld [vmem:[#allocation2 + $0x108] sm:$0xff]
    %v74 = vld [vmem:[#allocation2 + $0x110] sm:$0xff]
    %v75 = vld [vmem:[#allocation2 + $0x118] sm:$0xff]
    %v76 = vld [vmem:[#allocation2 + $0x120] sm:$0xff]
    %v77 = vld [vmem:[#allocation2 + $0x128] sm:$0xff]
    %v78 = vld [vmem:[#allocation2 + $0x130] sm:$0xff]
    %v79 = vld [vmem:[#allocation2 + $0x138] sm:$0xff]
    %v80 = vld [vmem:[#allocation2 + $0x140] sm:$0xff]
    %v81 = vld [vmem:[#allocation2 + $0x148] sm:$0xff]
    %v82 = vld [vmem:[#allocation2 + $0x150] sm:$0xff]
    %v83 = vld [vmem:[#allocation2 + $0x158] sm:$0xff]
    %v84 = vld [vmem:[#allocation2 + $0x160] sm:$0xff]
    %v85 = vld [vmem:[#allocation2 + $0x168] sm:$0xff]
    %v86 = vld [vmem:[#allocation2 + $0x170] sm:$0xff]
    %v87 = vld [vmem:[#allocation2 + $0x178] sm:$0xff]
    %v88 = vld [vmem:[#allocation2 + $0x180] sm:$0xff]
    %v89 = vld [vmem:[#allocation2 + $0x188] sm:$0xff]
    %v90 = vld [vmem:[#allocation2 + $0x190] sm:$0xff]
    %v91 = vld [vmem:[#allocation2 + $0x198] sm:$0xff]
    %v92 = vld [vmem:[#allocation2 + $0x1a0] sm:$0xff]
    %v93 = vld [vmem:[#allocation2 + $0x1a8] sm:$0xff]
    %v94 = vld [vmem:[#allocation2 + $0x1b0] sm:$0xff]
    %v95 = vld [vmem:[#allocation2 + $0x1b8] sm:$0xff]
    %v96 = vld [vmem:[#allocation2 + $0x1c0] sm:$0xff]
    %v97 = vld [vmem:[#allocation2 + $0x1c8] sm:$0xff]
    %v98 = vld [vmem:[#allocation2 + $0x1d0] sm:$0xff]
    %v99 = vld [vmem:[#allocation2 + $0x1d8] sm:$0xff]
    %v100 = vld [vmem:[#allocation2 + $0x1e0] sm:$0xff]
    %v101 = vld [vmem:[#allocation2 + $0x1e8] sm:$0xff]
    %v102 = vld [vmem:[#allocation2 + $0x1f0] sm:$0xff]
    %v103 = vld [vmem:[#allocation2 + $0x1f8] sm:$0xff]
    %104 = vmatprep.subr.mxu0 %v41
    %105 = vmatpush1.msra.mxu0 %v40
    %106 = vmatprep.subr.mxu0 %v43
    %107 = vmatpush1.msra.mxu0 %v42
    %108 = vmatprep.subr.mxu0 %v45
    %109 = vmatpush1.msra.mxu0 %v44
    %110 = vmatprep.subr.mxu0 %v47
    %111 = vmatpush1.msra.mxu0 %v46
    %112 = vmatprep.subr.mxu0 %v49
    %113 = vmatpush1.msra.mxu0 %v48
    %114 = vmatprep.subr.mxu0 %v51
    %115 = vmatpush1.msra.mxu0 %v50
    %116 = vmatprep.subr.mxu0 %v53
    %117 = vmatpush1.msra.mxu0 %v52
    %118 = vmatprep.subr.mxu0 %v55
    %119 = vmatpush1.msra.mxu0 %v54
    %120 = vmatprep.subr.mxu0 %v57
    %121 = vmatpush1.msra.mxu0 %v56
    %122 = vmatprep.subr.mxu0 %v59
    %123 = vmatpush1.msra.mxu0 %v58
    %124 = vmatprep.subr.mxu0 %v61
    %125 = vmatpush1.msra.mxu0 %v60
    %126 = vmatprep.subr.mxu0 %v63
    %127 = vmatpush1.msra.mxu0 %v62
    %128 = vmatprep.subr.mxu0 %v65
    %129 = vmatpush1.msra.mxu0 %v64
    %130 = vmatprep.subr.mxu0 %v67
    %131 = vmatpush1.msra.mxu0 %v66
    %132 = vmatprep.subr.mxu0 %v69
    %133 = vmatpush1.msra.mxu0 %v68
    %134 = vmatprep.subr.mxu0 %v71
    %135 = vmatpush1.msra.mxu0 %v70
    %136 = vmatprep.subr.mxu0 %v73
    %137 = vmatpush1.msra.mxu0 %v72
    %138 = vmatprep.subr.mxu0 %v75
    %139 = vmatpush1.msra.mxu0 %v74
    %140 = vmatprep.subr.mxu0 %v77
    %141 = vmatpush1.msra.mxu0 %v76
    %142 = vmatprep.subr.mxu0 %v79
    %143 = vmatpush1.msra.mxu0 %v78
    %144 = vmatprep.subr.mxu0 %v81
    %145 = vmatpush1.msra.mxu0 %v80
    %146 = vmatprep.subr.mxu0 %v83
    %147 = vmatpush1.msra.mxu0 %v82
    %148 = vmatprep.subr.mxu0 %v85
    %149 = vmatpush1.msra.mxu0 %v84
    %150 = vmatprep.subr.mxu0 %v87
    %151 = vmatpush1.msra.mxu0 %v86
    %152 = vmatprep.subr.mxu0 %v89
    %153 = vmatpush1.msra.mxu0 %v88
    %154 = vmatprep.subr.mxu0 %v91
    %155 = vmatpush1.msra.mxu0 %v90
    %156 = vmatprep.subr.mxu0 %v93
    %157 = vmatpush1.msra.mxu0 %v92
    %158 = vmatprep.subr.mxu0 %v95
    %159 = vmatpush1.msra.mxu0 %v94
    %160 = vmatprep.subr.mxu0 %v97
    %161 = vmatpush1.msra.mxu0 %v96
    %162 = vmatprep.subr.mxu0 %v99
    %163 = vmatpush1.msra.mxu0 %v98
    %164 = vmatprep.subr.mxu0 %v101
    %165 = vmatpush1.msra.mxu0 %v100
    %166 = vmatprep.subr.mxu0 %v103
    %167 = vmatpush1.msra.mxu0 %v102
    %168 = vmatprep.mubr.f32.mxu0 %v39
    %169 = vmatmul.mubr.f32.gmra.mrb[0].mxu0 %v38
    %v170 = vpop.f32.mrb[0].mxu0
    %v171 = vadd.f32 0.0, %v170
    %v172 = vpop.f32.mrb[0].mxu0
    %v173 = vadd.f32 0.0, %v172
    %174 = vdwg.mxu0
    %175 = vst [vmem:[#allocation7] sm:$0xff] %v171
    %176 = vst [vmem:[#allocation7 + $0x8] sm:$0xff] %v173
    // Predicated region
    $region18: #{tpu_custom_call.1} parent=1 // pred_check
      _
    $region19: #{tpu_custom_call.1} parent=1 // pred_check_branch
      %178 = sbr.rel (0) target = $region21
    $region20: #{tpu_custom_call.1} parent=1 // pred_region
      %s180 = ssub.s32 256, 256
      %181 = vsyncadd [#allocation4], %s180
      %s183 = sshll.u32 [#allocation7], 4
      %s184 = int_to_ptr.vmem [resolvable:$true] %s183
      %186 = dma.vmem_to_hbm [thread:$0]  %s184, 256, %s2, [#allocation4]
    $region21: #{tpu_custom_call.1} parent=1 // pred_fallthru
      _
    // Predicated region
    $region22: #{tpu_custom_call.1} parent=1 // pred_check
      _
    $region23: #{tpu_custom_call.1} parent=1 // pred_check_branch
      %188 = sbr.rel (0) target = $region25
    $region24: #{tpu_custom_call.1} parent=1 // pred_region
      %189 = dma.done [#allocation4], 256
    $region25: #{tpu_custom_call.1} parent=1 // pred_fallthru
      _
    %190 = vsyncpa [#allocation3], 1
    %191 = vsyncpa [#allocation6], 1
    %192 = vsyncpa [#allocation4], 1

</llo_original>
